<compile_context>
chip_gen: v6e
topology: v6e:2x2x1
jax: 0.10.0
libtpu: 0.0.40
codegen_flags: <defaults>
</compile_context>

<pallas_src>
import functools

import jax
import jax.numpy as jnp
from jax import lax
from jax.experimental import pallas as pl
from jax.experimental.pallas import tpu as pltpu

CLAMP_EPS = 1e-6   # CoxSurvLoss.eps (clamp on the risk)
CPH_EPS = 1e-7     # CoxPHLoss internal eps on the cumulative sum
_LANES = 128
_SUBLANES = 8
_NEG = -1e30       # "minus infinity" for padded log_h (finite: exp() -> 0, no NaNs)


def _cox_kernel(risk_ref, event_ref, o_ref, *, n):
    # risk_ref / event_ref: (G, 128) tiles; row-major order == sorted order
    # (duration descending).  Positions >= n are padding.
    G, L = risk_ref.shape
    risk = risk_ref[...]                      # (G, L) f32
    event = event_ref[...]                    # (G, L) f32 (padding already 0)

    rr = lax.broadcasted_iota(jnp.int32, (G, L), 0)
    cc = lax.broadcasted_iota(jnp.int32, (G, L), 1)
    valid = (rr * L + cc) < n                 # (G, L) bool

    # clamp(min=eps).log(), padded entries forced to a huge negative value so
    # they neither win the max nor contribute to the cumulative sum.
    log_h = jnp.where(valid, jnp.log(jnp.maximum(risk, CLAMP_EPS)), _NEG)

    gamma = jnp.max(log_h)                    # scalar (max over valid entries)
    ex = jnp.exp(log_h - gamma)               # (G, L); padded -> exp(-huge) == 0

    # --- inclusive prefix sum in row-major (sorted) order -------------------
    # 1) within-row inclusive scan: one (128,128) triangular matmul on the MXU.
    jj = lax.broadcasted_iota(jnp.int32, (L, L), 0)   # source lane
    kk = lax.broadcasted_iota(jnp.int32, (L, L), 1)   # destination lane
    lower_incl = (jj <= kk).astype(jnp.float32)       # (L, L)
    cs_row = jnp.dot(ex, lower_incl,
                     preferred_element_type=jnp.float32)   # (G, L)

    # 2) carry from all previous rows: strictly-lower (G,G) matmul; the last
    #    lane of the result is the exclusive prefix of the row totals.
    gg = lax.broadcasted_iota(jnp.int32, (G, G), 0)   # destination row
    hh = lax.broadcasted_iota(jnp.int32, (G, G), 1)   # source row
    strict_lower = (hh < gg).astype(jnp.float32)      # (G, G)
    prev_rows = jnp.dot(strict_lower, cs_row,
                        preferred_element_type=jnp.float32)  # (G, L)
    carry = prev_rows[:, L - 1:L]                     # (G, 1)
    cs = cs_row + carry                               # (G, L) inclusive prefix

    log_cumsum_h = jnp.log(cs + CPH_EPS) + gamma      # (G, L)

    contrib = jnp.where(valid, (log_h - log_cumsum_h) * event, 0.0)
    num = jnp.sum(contrib, axis=(0, 1), keepdims=True)          # (1, 1)
    den = jnp.sum(event, axis=(0, 1), keepdims=True)            # (1, 1)
    den = jnp.maximum(den, 1.0)   # guard: no observed events -> loss 0, not NaN
    o_ref[...] = -num / den


def cox_surv_loss(risk, duration, event):
    """risk, duration, event: 1-D arrays of length N. Returns scalar loss."""
    risk = jnp.asarray(risk, jnp.float32).reshape(-1)
    duration = jnp.asarray(duration, jnp.float32).reshape(-1)
    event = jnp.asarray(event, jnp.float32).reshape(-1)
    n = risk.shape[0]

    # glue: sort by duration descending (data-dependent permutation)
    idx = jnp.argsort(-duration)
    risk_s = risk[idx]
    event_s = event[idx]

    # pad to a multiple of 8*128 and lay out lane-dense as (G, 128), row-major
    block = _SUBLANES * _LANES
    n_pad = ((n + block - 1) // block) * block
    pad = n_pad - n
    g = n_pad // _LANES
    risk_p = jnp.pad(risk_s, (0, pad), constant_values=1.0).reshape(g, _LANES)
    event_p = jnp.pad(event_s, (0, pad), constant_values=0.0).reshape(g, _LANES)

    out = pl.pallas_call(
        functools.partial(_cox_kernel, n=n),
        out_shape=jax.ShapeDtypeStruct((1, 1), jnp.float32),
        grid=(1,),
        in_specs=[
            pl.BlockSpec((g, _LANES), lambda i: (0, 0)),
            pl.BlockSpec((g, _LANES), lambda i: (0, 0)),
        ],
        out_specs=pl.BlockSpec((1, 1), lambda i: (0, 0)),
        compiler_params=pltpu.CompilerParams(
            dimension_semantics=("arbitrary",)),
    )(risk_p, event_p)
    return out[0, 0]


def _reference(risk, duration, event):
    # pure-JAX reference of the same math (for a sanity check)
    risk = jnp.asarray(risk, jnp.float32).reshape(-1)
    event = jnp.asarray(event, jnp.float32).reshape(-1)
    idx = jnp.argsort(-jnp.asarray(duration, jnp.float32).reshape(-1))
    log_h = jnp.log(jnp.maximum(risk[idx], CLAMP_EPS))
    ev = event[idx]
    gamma = jnp.max(log_h)
    log_cumsum = jnp.log(jnp.cumsum(jnp.exp(log_h - gamma)) + CPH_EPS) + gamma
    den = jnp.maximum(jnp.sum(ev), 1.0)
    return -jnp.sum((log_h - log_cumsum) * ev) / den


if __name__ == "__main__":
    key = jax.random.PRNGKey(0)
    k1, k2, k3 = jax.random.split(key, 3)
    n = 32  # batch size

    # outputs.risk: positive risk scores; data['duration'], data['event']
    risk = jax.random.uniform(k1, (n,), minval=0.05, maxval=5.0, dtype=jnp.float32)
    duration = jax.random.uniform(k2, (n,), minval=0.1, maxval=10.0, dtype=jnp.float32)
    event = (jax.random.uniform(k3, (n,)) > 0.3).astype(jnp.float32)
    event = event.at[0].set(1.0)  # ensure at least one observed event

    loss = cox_surv_loss(risk, duration, event)
    jax.block_until_ready(loss)

    ref = _reference(risk, duration, event)
    assert jnp.allclose(loss, ref, rtol=1e-4, atol=1e-5), (loss, ref)

    print("KERNEL_OK")
</pallas_src>

<mosaic_0001>
module attributes {stable_mosaic.version = 11 : i64} {
  func.func @_cox_kernel(%arg0: i32, %arg1: memref<8x128xf32, #tpu.memory_space<vmem>>, %arg2: memref<8x128xf32, #tpu.memory_space<vmem>>, %arg3: memref<1x1xf32, #tpu.memory_space<vmem>>) attributes {dimension_semantics = [#tpu.dimension_semantics<arbitrary>], iteration_bounds = array<i64: 1>, scalar_prefetch = 0 : i64, scratch_operands = 0 : i64, tpu.core_type = #tpu.core_type<tc>, window_params = [{pipeline_mode = #tpu.pipeline_mode<synchronous>, transform_indices = @transform_0, window_bounds = array<i64: 8, 128>}, {pipeline_mode = #tpu.pipeline_mode<synchronous>, transform_indices = @transform_1, window_bounds = array<i64: 8, 128>}, {pipeline_mode = #tpu.pipeline_mode<synchronous>, transform_indices = @transform_2, window_bounds = array<i64: 1, 1>}]} {
    %c0 = arith.constant 0 : index
    %c0_0 = arith.constant 0 : index
    %0 = vector.load %arg1[%c0, %c0_0] : memref<8x128xf32, #tpu.memory_space<vmem>>, vector<8x128xf32>
    %c0_1 = arith.constant 0 : index
    %c0_2 = arith.constant 0 : index
    %1 = vector.load %arg2[%c0_1, %c0_2] : memref<8x128xf32, #tpu.memory_space<vmem>>, vector<8x128xf32>
    %2 = tpu.iota {dimensions = array<i32: 0>} : vector<8x128xi32>
    %3 = tpu.iota {dimensions = array<i32: 1>} : vector<8x128xi32>
    %c128_i32 = arith.constant 128 : i32
    %4 = vector.broadcast %c128_i32 : i32 to vector<8x128xi32>
    %5 = arith.muli %2, %4 : vector<8x128xi32>
    %6 = arith.addi %5, %3 : vector<8x128xi32>
    %c32_i32 = arith.constant 32 : i32
    %7 = vector.broadcast %c32_i32 : i32 to vector<8x128xi32>
    %8 = arith.cmpi slt, %6, %7 : vector<8x128xi32>
    %cst = arith.constant 9.99999997E-7 : f32
    %9 = vector.broadcast %cst : f32 to vector<8x128xf32>
    %10 = arith.maximumf %0, %9 : vector<8x128xf32>
    %11 = math.log %10 : vector<8x128xf32>
    %cst_3 = arith.constant -1.000000e+30 : f32
    %12 = vector.broadcast %cst_3 : f32 to vector<8x128xf32>
    %13 = arith.select %8, %11, %12 : vector<8x128xi1>, vector<8x128xf32>
    %14 = vector.shape_cast %13 : vector<8x128xf32> to vector<1x8x128xf32>
    %cst_4 = arith.constant dense<0xFF800000> : vector<1xf32>
    %15 = vector.multi_reduction <maximumf>, %14, %cst_4 [1, 2] : vector<1x8x128xf32> to vector<1xf32>
    %16 = vector.shape_cast %15 : vector<1xf32> to vector<1x1x1xf32>
    %17 = vector.extract %16[0, 0, 0] : f32 from vector<1x1x1xf32>
    %18 = vector.broadcast %17 : f32 to vector<8x128xf32>
    %19 = arith.subf %13, %18 : vector<8x128xf32>
    %20 = math.exp %19 : vector<8x128xf32>
    %21 = tpu.iota {dimensions = array<i32: 0>} : vector<128x128xi32>
    %22 = tpu.iota {dimensions = array<i32: 1>} : vector<128x128xi32>
    %23 = arith.cmpi sle, %21, %22 : vector<128x128xi32>
    %24 = arith.extui %23 : vector<128x128xi1> to vector<128x128xi32>
    %25 = arith.sitofp %24 : vector<128x128xi32> to vector<128x128xf32>
    %cst_5 = arith.constant dense<0.000000e+00> : vector<8x128xf32>
    %26 = tpu.matmul %20, %25, %cst_5 {dimension_numbers = #tpu.dot_dimension_numbers<[1], [0], [0], [1], [0, 0, 1, 1], [], []>} : vector<8x128xf32>, vector<128x128xf32>, vector<8x128xf32> -> vector<8x128xf32>
    %27 = tpu.iota {dimensions = array<i32: 0>} : vector<8x8xi32>
    %28 = tpu.iota {dimensions = array<i32: 1>} : vector<8x8xi32>
    %29 = arith.cmpi slt, %28, %27 : vector<8x8xi32>
    %30 = arith.extui %29 : vector<8x8xi1> to vector<8x8xi32>
    %31 = arith.sitofp %30 : vector<8x8xi32> to vector<8x8xf32>
    %cst_6 = arith.constant dense<0.000000e+00> : vector<8x128xf32>
    %32 = tpu.matmul %31, %26, %cst_6 {dimension_numbers = #tpu.dot_dimension_numbers<[1], [0], [0], [1], [0, 0, 1, 1], [], []>} : vector<8x8xf32>, vector<8x128xf32>, vector<8x128xf32> -> vector<8x128xf32>
    %33 = vector.extract_strided_slice %32 {offsets = [0, 127], sizes = [8, 1], strides = [1, 1]} : vector<8x128xf32> to vector<8x1xf32>
    %34 = vector.broadcast %33 : vector<8x1xf32> to vector<8x128xf32>
    %35 = arith.addf %26, %34 : vector<8x128xf32>
    %cst_7 = arith.constant 1.000000e-07 : f32
    %36 = vector.broadcast %cst_7 : f32 to vector<8x128xf32>
    %37 = arith.addf %35, %36 : vector<8x128xf32>
    %38 = math.log %37 : vector<8x128xf32>
    %39 = vector.broadcast %17 : f32 to vector<8x128xf32>
    %40 = arith.addf %38, %39 : vector<8x128xf32>
    %41 = arith.subf %13, %40 : vector<8x128xf32>
    %42 = arith.mulf %41, %1 : vector<8x128xf32>
    %cst_8 = arith.constant 0.000000e+00 : f32
    %43 = vector.broadcast %cst_8 : f32 to vector<8x128xf32>
    %44 = arith.select %8, %42, %43 : vector<8x128xi1>, vector<8x128xf32>
    %45 = vector.shape_cast %44 : vector<8x128xf32> to vector<1x8x128xf32>
    %cst_9 = arith.constant dense<0.000000e+00> : vector<1xf32>
    %46 = vector.multi_reduction <add>, %45, %cst_9 [1, 2] : vector<1x8x128xf32> to vector<1xf32>
    %47 = vector.shape_cast %46 : vector<1xf32> to vector<1x1x1xf32>
    %48 = vector.extract %47[0, 0, 0] : f32 from vector<1x1x1xf32>
    %49 = vector.broadcast %48 : f32 to vector<1x1xf32>
    %50 = vector.shape_cast %1 : vector<8x128xf32> to vector<1x8x128xf32>
    %cst_10 = arith.constant dense<0.000000e+00> : vector<1xf32>
    %51 = vector.multi_reduction <add>, %50, %cst_10 [1, 2] : vector<1x8x128xf32> to vector<1xf32>
    %52 = vector.shape_cast %51 : vector<1xf32> to vector<1x1x1xf32>
    %53 = vector.extract %52[0, 0, 0] : f32 from vector<1x1x1xf32>
    %54 = vector.broadcast %53 : f32 to vector<1x1xf32>
    %cst_11 = arith.constant 1.000000e+00 : f32
    %55 = vector.broadcast %cst_11 : f32 to vector<1x1xf32>
    %56 = arith.maximumf %54, %55 : vector<1x1xf32>
    %cst_12 = arith.constant 0.000000e+00 : f32
    %57 = vector.broadcast %cst_12 : f32 to vector<1x1xf32>
    %58 = arith.subf %57, %49 : vector<1x1xf32>
    %59 = arith.divf %58, %56 : vector<1x1xf32>
    %c0_13 = arith.constant 0 : index
    %c0_14 = arith.constant 0 : index
    %60 = vector.load %arg3[%c0_13, %c0_14] : memref<1x1xf32, #tpu.memory_space<vmem>>, vector<1x1xf32>
    tpu.vector_store %arg3[%c0_13, %c0_14], %59 {strides = array<i32>} : memref<1x1xf32, #tpu.memory_space<vmem>>, vector<1x1xf32>,
    return
  }
  func.func @transform_0(%arg0: i32) -> (i32, i32) {
    %c0_i32 = arith.constant 0 : i32
    %c0_i32_0 = arith.constant 0 : i32
    %c0_i32_1 = arith.constant 0 : i32
    return %c0_i32, %c0_i32_0 : i32, i32
  }
  func.func @transform_1(%arg0: i32) -> (i32, i32) {
    %c0_i32 = arith.constant 0 : i32
    %c0_i32_0 = arith.constant 0 : i32
    %c0_i32_1 = arith.constant 0 : i32
    return %c0_i32, %c0_i32_0 : i32, i32
  }
  func.func @transform_2(%arg0: i32) -> (i32, i32) {
    %c0_i32 = arith.constant 0 : i32
    %c0_i32_0 = arith.constant 0 : i32
    %c0_i32_1 = arith.constant 0 : i32
    return %c0_i32, %c0_i32_0 : i32, i32
  }
}

</mosaic_0001>

<llo_original>
// kernel: tpu_custom_call.1
$region0: #{tpu_custom_call.1}
  #allocation0 [shape = 'u32[]', space=smem, size = 0x4, offset = 0x4, fixed_abs, tag = 'smem constant byte address 0x4 - core index']
  #allocation1 [shape = 'u32[144,128]{1,0:T(1,128)}', space=vmem, size = 0x12000, scoped, tag = 'internal scratch']
  %s0 = inlined_call_operand.hbm [shape: f32[8,128], index: 0, kind: input, shape index: {}]
  %s1 = inlined_call_operand.hbm [shape: f32[8,128], index: 1, kind: input, shape index: {}]
  %s2 = inlined_call_operand.hbm [shape: f32[1,1], index: 2, kind: output, shape index: {}]
  %s3 = sld [smem:[#allocation0]]
  $region26: #{tpu_custom_call.1} parent=0
    _
  %s5 = ssub.s32 1, %s3
  %s6 = scalar_select 0, %s5, %s3
  $region1: #{tpu_custom_call.1} parent=0
    #allocation2 [shape = 'u8[4096]{0}', space=vmem, size = 0x1000, scoped, tag = 'input window, operand 0, single buffered']
    #allocation3 [shape = 's32[1]{0}', space=sflag, size = 0x4, scoped, tag = 'scoped memory for tpu_custom_call.1']
    #allocation4 [shape = 's32[1]{0}', space=sflag, size = 0x4, scoped, tag = 'scoped memory for tpu_custom_call.1']
    #allocation5 [shape = 'u8[4096]{0}', space=vmem, size = 0x1000, scoped, tag = 'input window, operand 1, single buffered']
    #allocation6 [shape = 's32[1]{0}', space=sflag, size = 0x4, scoped, tag = 'scoped memory for tpu_custom_call.1']
    #allocation7 [shape = 'u8[512]{0}', space=vmem, size = 0x400, scoped, tag = 'output window, operand 0, single buffered']
    %7 = vsyncpa [#allocation3], 0
    %8 = vsyncpa [#allocation6], 0
    %9 = vsyncpa [#allocation4], 0
    // Predicated region
    $region2: #{tpu_custom_call.1} parent=1 // pred_check
      _
    $region3: #{tpu_custom_call.1} parent=1 // pred_check_branch
      %11 = sbr.rel (0) target = $region5
    $region4: #{tpu_custom_call.1} parent=1 // pred_region
      %s13 = ssub.s32 128, 128
      %14 = vsyncadd [#allocation3], %s13
      %s16 = sshll.u32 [#allocation2], 4
      %s17 = int_to_ptr.vmem [resolvable:$true] %s16
      %19 = dma.hbm_to_vmem [thread:$0]  %s0, 128, %s17, [#allocation3]
    $region5: #{tpu_custom_call.1} parent=1 // pred_fallthru
      _
    // Predicated region
    $region6: #{tpu_custom_call.1} parent=1 // pred_check
      _
    $region7: #{tpu_custom_call.1} parent=1 // pred_check_branch
      %21 = sbr.rel (0) target = $region9
    $region8: #{tpu_custom_call.1} parent=1 // pred_region
      %s23 = ssub.s32 128, 128
      %24 = vsyncadd [#allocation6], %s23
      %s26 = sshll.u32 [#allocation5], 4
      %s27 = int_to_ptr.vmem [resolvable:$true] %s26
      %29 = dma.hbm_to_vmem [thread:$0]  %s1, 128, %s27, [#allocation6]
    $region9: #{tpu_custom_call.1} parent=1 // pred_fallthru
      _
    // Predicated region
    $region10: #{tpu_custom_call.1} parent=1 // pred_check
      _
    $region11: #{tpu_custom_call.1} parent=1 // pred_check_branch
      %31 = sbr.rel (0) target = $region13
    $region12: #{tpu_custom_call.1} parent=1 // pred_region
      %32 = dma.done [#allocation3], 128
    $region13: #{tpu_custom_call.1} parent=1 // pred_fallthru
      _
    // Predicated region
    $region14: #{tpu_custom_call.1} parent=1 // pred_check
      _
    $region15: #{tpu_custom_call.1} parent=1 // pred_check_branch
      %34 = sbr.rel (0) target = $region17
    $region16: #{tpu_custom_call.1} parent=1 // pred_region
      %35 = dma.done [#allocation6], 128
    $region17: #{tpu_custom_call.1} parent=1 // pred_fallthru
      _
    %v36 = vld [vmem:[#allocation2] sm:$0xff]
    %v37 = vld [vmem:[#allocation5] sm:$0xff]
    %v38 = vlaneseq
    %v39 = vshrl.u32 %v38, 7
    %v40 = vlaneseq
    %v41 = vand.u32 %v40, 127
    %v42 = vmul.u32 %v39, 128
    %v43 = vadd.s32 %v42, %v41
    %vm44 = vcmp.lt.s32.totalorder %v43, 32
    %v45 = vmax.f32 %v36, 1e-06
    %v46 = vlog2.pop %v45
    %v47 = vmul.f32 %v46, 0.6931472
    %v48 = vsel %vm44, %v47, -1e+30
    %49 = vmax.xlane.f32.xlu0 %v48
    %v50 = vpop.xlane.xlu0 %49
    %v51 = vrot.slane %v50, 4
    %v52 = vmax.f32 %v50, %v51
    %v53 = vrot.slane %v52, 2
    %v54 = vmax.f32 %v52, %v53
    %v55 = vrot.slane %v54, 1
    %v56 = vmax.f32 %v54, %v55
    %s57 = vtos %v56
    %v58 = vstv %s57
    %v59 = vsub.f32 %v48, %v58
    %v60 = vmul.f32 %v59, 1.442695
    %v61 = vpow.pop %v60
    %v62 = vadd.s32 %v39, 8
    %v63 = vadd.s32 %v39, 16
    %v64 = vadd.s32 %v39, 24
    %v65 = vadd.s32 %v39, 32
    %v66 = vadd.s32 %v39, 40
    %v67 = vadd.s32 %v39, 48
    %v68 = vadd.s32 %v39, 56
    %v69 = vadd.s32 %v39, 64
    %v70 = vadd.s32 %v39, 72
    %v71 = vadd.s32 %v39, 80
    %v72 = vadd.s32 %v39, 88
    %v73 = vadd.s32 %v39, 96
    %v74 = vadd.s32 %v39, 104
    %v75 = vadd.s32 %v39, 112
    %v76 = vadd.s32 %v39, 120
    %vm77 = vcmp.le.s32.totalorder %v39, %v41
    %vm78 = vcmp.le.s32.totalorder %v62, %v41
    %vm79 = vcmp.le.s32.totalorder %v63, %v41
    %vm80 = vcmp.le.s32.totalorder %v64, %v41
    %vm81 = vcmp.le.s32.totalorder %v65, %v41
    %vm82 = vcmp.le.s32.totalorder %v66, %v41
    %vm83 = vcmp.le.s32.totalorder %v67, %v41
    %vm84 = vcmp.le.s32.totalorder %v68, %v41
    %vm85 = vcmp.le.s32.totalorder %v69, %v41
    %vm86 = vcmp.le.s32.totalorder %v70, %v41
    %vm87 = vcmp.le.s32.totalorder %v71, %v41
    %vm88 = vcmp.le.s32.totalorder %v72, %v41
    %vm89 = vcmp.le.s32.totalorder %v73, %v41
    %vm90 = vcmp.le.s32.totalorder %v74, %v41
    %vm91 = vcmp.le.s32.totalorder %v75, %v41
    %vm92 = vcmp.le.s32.totalorder %v76, %v41
    %v93 = vsel %vm77, 1, 0
    %v94 = vsel %vm78, 1, 0
    %v95 = vsel %vm79, 1, 0
    %v96 = vsel %vm80, 1, 0
    %v97 = vsel %vm81, 1, 0
    %v98 = vsel %vm82, 1, 0
    %v99 = vsel %vm83, 1, 0
    %v100 = vsel %vm84, 1, 0
    %v101 = vsel %vm85, 1, 0
    %v102 = vsel %vm86, 1, 0
    %v103 = vsel %vm87, 1, 0
    %v104 = vsel %vm88, 1, 0
    %v105 = vsel %vm89, 1, 0
    %v106 = vsel %vm90, 1, 0
    %v107 = vsel %vm91, 1, 0
    %v108 = vsel %vm92, 1, 0
    %v109 = vcvt.s32.f32 %v93
    %v110 = vcvt.s32.f32 %v94
    %v111 = vcvt.s32.f32 %v95
    %v112 = vcvt.s32.f32 %v96
    %v113 = vcvt.s32.f32 %v97
    %v114 = vcvt.s32.f32 %v98
    %v115 = vcvt.s32.f32 %v99
    %v116 = vcvt.s32.f32 %v100
    %v117 = vcvt.s32.f32 %v101
    %v118 = vcvt.s32.f32 %v102
    %v119 = vcvt.s32.f32 %v103
    %v120 = vcvt.s32.f32 %v104
    %v121 = vcvt.s32.f32 %v105
    %v122 = vcvt.s32.f32 %v106
    %v123 = vcvt.s32.f32 %v107
    %v124 = vcvt.s32.f32 %v108
    %125 = vmatprep.subr.mxu0 0.0
    %126 = vmatpush1.msra.mxu0 %v124
    %127 = vmatprep.subr.mxu0 0.0
    %128 = vmatpush1.msra.mxu0 %v123
    %129 = vmatprep.subr.mxu0 0.0
    %130 = vmatpush1.msra.mxu0 %v122
    %131 = vmatprep.subr.mxu0 0.0
    %132 = vmatpush1.msra.mxu0 %v121
    %133 = vmatprep.subr.mxu0 0.0
    %134 = vmatpush1.msra.mxu0 %v120
    %135 = vmatprep.subr.mxu0 0.0
    %136 = vmatpush1.msra.mxu0 %v119
    %137 = vmatprep.subr.mxu0 0.0
    %138 = vmatpush1.msra.mxu0 %v118
    %139 = vmatprep.subr.mxu0 0.0
    %140 = vmatpush1.msra.mxu0 %v117
    %141 = vmatprep.subr.mxu0 0.0
    %142 = vmatpush1.msra.mxu0 %v116
    %143 = vmatprep.subr.mxu0 0.0
    %144 = vmatpush1.msra.mxu0 %v115
    %145 = vmatprep.subr.mxu0 0.0
    %146 = vmatpush1.msra.mxu0 %v114
    %147 = vmatprep.subr.mxu0 0.0
    %148 = vmatpush1.msra.mxu0 %v113
    %149 = vmatprep.subr.mxu0 0.0
    %150 = vmatpush1.msra.mxu0 %v112
    %151 = vmatprep.subr.mxu0 0.0
    %152 = vmatpush1.msra.mxu0 %v111
    %153 = vmatprep.subr.mxu0 0.0
    %154 = vmatpush1.msra.mxu0 %v110
    %155 = vmatprep.subr.mxu0 0.0
    %156 = vmatpush1.msra.mxu0 %v109
    %157 = vmatprep.subr.mxu0 0.0
    %158 = vmatpush2.msra.mxu0 0.0
    %159 = vmatprep.subr.mxu0 0.0
    %160 = vmatpush2.msra.mxu0 0.0
    %161 = vmatprep.subr.mxu0 0.0
    %162 = vmatpush2.msra.mxu0 0.0
    %163 = vmatprep.subr.mxu0 0.0
    %164 = vmatpush2.msra.mxu0 0.0
    %165 = vmatprep.subr.mxu0 0.0
    %166 = vmatpush2.msra.mxu0 0.0
    %167 = vmatprep.subr.mxu0 0.0
    %168 = vmatpush2.msra.mxu0 0.0
    %169 = vmatprep.subr.mxu0 0.0
    %170 = vmatpush2.msra.mxu0 0.0
    %171 = vmatprep.subr.mxu0 0.0
    %172 = vmatpush2.msra.mxu0 0.0
    %173 = vmatprep.subr.mxu0 0.0
    %174 = vmatpush2.msra.mxu0 0.0
    %175 = vmatprep.subr.mxu0 0.0
    %176 = vmatpush2.msra.mxu0 0.0
    %177 = vmatprep.subr.mxu0 0.0
    %178 = vmatpush2.msra.mxu0 0.0
    %179 = vmatprep.subr.mxu0 0.0
    %180 = vmatpush2.msra.mxu0 0.0
    %181 = vmatprep.subr.mxu0 0.0
    %182 = vmatpush2.msra.mxu0 0.0
    %183 = vmatprep.subr.mxu0 0.0
    %184 = vmatpush2.msra.mxu0 0.0
    %185 = vmatprep.subr.mxu0 0.0
    %186 = vmatpush2.msra.mxu0 0.0
    %187 = vmatprep.subr.mxu0 0.0
    %188 = vmatpush2.msra.mxu0 0.0
    %189 = vmatprep.mubr.f32.mxu0 0.0
    %190 = vmatmul.mubr.f32.gmra.mxu0 %v61
    %v191 = vpop.f32.mrf.mxu0
    %v192 = vadd.f32 0.0, %v191
    %v193 = vpop.f32.mrf.mxu0
    %194 = vdwg.mxu0
    %vm195 = vcmp.lt.s32.totalorder %v41, %v39
    %v196 = vsel %vm195, 1, 0
    %v197 = vcvt.s32.f32 %v196
    %vm198 = vcmask 64512
    %v200 = vsel %vm198, %v197, 0
    %202 = vmatprep.subr.mxu0 0.0
    %203 = vmatpush1.msra.mxu0 0.0
    %204 = vmatprep.subr.mxu0 0.0
    %205 = vmatpush1.msra.mxu0 0.0
    %206 = vmatprep.subr.mxu0 0.0
    %207 = vmatpush1.msra.mxu0 0.0
    %208 = vmatprep.subr.mxu0 0.0
    %209 = vmatpush1.msra.mxu0 0.0
    %210 = vmatprep.subr.mxu0 0.0
    %211 = vmatpush1.msra.mxu0 0.0
    %212 = vmatprep.subr.mxu0 0.0
    %213 = vmatpush1.msra.mxu0 0.0
    %214 = vmatprep.subr.mxu0 0.0
    %215 = vmatpush1.msra.mxu0 0.0
    %216 = vmatprep.subr.mxu0 0.0
    %217 = vmatpush1.msra.mxu0 0.0
    %218 = vmatprep.subr.mxu0 0.0
    %219 = vmatpush1.msra.mxu0 0.0
    %220 = vmatprep.subr.mxu0 0.0
    %221 = vmatpush1.msra.mxu0 0.0
    %222 = vmatprep.subr.mxu0 0.0
    %223 = vmatpush1.msra.mxu0 0.0
    %224 = vmatprep.subr.mxu0 0.0
    %225 = vmatpush1.msra.mxu0 0.0
    %226 = vmatprep.subr.mxu0 0.0
    %227 = vmatpush1.msra.mxu0 0.0
    %228 = vmatprep.subr.mxu0 0.0
    %229 = vmatpush1.msra.mxu0 0.0
    %230 = vmatprep.subr.mxu0 0.0
    %231 = vmatpush1.msra.mxu0 0.0
    %232 = vmatprep.subr.mxu0 0.0
    %233 = vmatpush1.msra.mxu0 %v192
    %234 = vmatprep.subr.mxu0 0.0
    %235 = vmatpush2.msra.mxu0 0.0
    %236 = vmatprep.subr.mxu0 0.0
    %237 = vmatpush2.msra.mxu0 0.0
    %238 = vmatprep.subr.mxu0 0.0
    %239 = vmatpush2.msra.mxu0 0.0
    %240 = vmatprep.subr.mxu0 0.0
    %241 = vmatpush2.msra.mxu0 0.0
    %242 = vmatprep.subr.mxu0 0.0
    %243 = vmatpush2.msra.mxu0 0.0
    %244 = vmatprep.subr.mxu0 0.0
    %245 = vmatpush2.msra.mxu0 0.0
    %246 = vmatprep.subr.mxu0 0.0
    %247 = vmatpush2.msra.mxu0 0.0
    %248 = vmatprep.subr.mxu0 0.0
    %249 = vmatpush2.msra.mxu0 0.0
    %250 = vmatprep.subr.mxu0 0.0
    %251 = vmatpush2.msra.mxu0 0.0
    %252 = vmatprep.subr.mxu0 0.0
    %253 = vmatpush2.msra.mxu0 0.0
    %254 = vmatprep.subr.mxu0 0.0
    %255 = vmatpush2.msra.mxu0 0.0
    %256 = vmatprep.subr.mxu0 0.0
    %257 = vmatpush2.msra.mxu0 0.0
    %258 = vmatprep.subr.mxu0 0.0
    %259 = vmatpush2.msra.mxu0 0.0
    %260 = vmatprep.subr.mxu0 0.0
    %261 = vmatpush2.msra.mxu0 0.0
    %262 = vmatprep.subr.mxu0 0.0
    %263 = vmatpush2.msra.mxu0 0.0
    %264 = vmatprep.subr.mxu0 0.0
    %265 = vmatpush2.msra.mxu0 0.0
    %266 = vmatprep.mubr.f32.mxu0 0.0
    %267 = vmatmul.mubr.f32.gmra.mxu0 %v200
    %v268 = vpop.f32.mrf.mxu0
    %v269 = vadd.f32 0.0, %v268
    %v270 = vpop.f32.mrf.mxu0
    %271 = vdwg.mxu0
    %273 = vset.pattern.permute.xlu0 127
    %274 = vperm.xlu0 %273, %v269
    %v275 = vpop.permute.xlu0 %274
    %v277 = vadd.f32 %v192, %v275
    %v278 = vadd.f32 %v277, 1e-07
    %v279 = vlog2.pop %v278
    %v280 = vmul.f32 %v279, 0.6931472
    %v281 = vadd.f32 %v280, %v58
    %v282 = vsub.f32 %v48, %v281
    %v283 = vmul.f32 %v282, %v37
    %v284 = vsel %vm44, %v283, 0.0
    %285 = vadd.xlane.f32.xlu0 %v284
    %v286 = vpop.xlane.xlu0 %285
    %v287 = vrot.slane %v286, 4
    %v288 = vadd.f32 %v286, %v287
    %v289 = vrot.slane %v288, 2
    %v290 = vadd.f32 %v288, %v289
    %v291 = vrot.slane %v290, 1
    %v292 = vadd.f32 %v290, %v291
    %s293 = vtos %v292
    %v294 = vstv %s293
    %295 = vadd.xlane.f32.xlu0 %v37
    %v296 = vpop.xlane.xlu0 %295
    %v297 = vrot.slane %v296, 4
    %v298 = vadd.f32 %v296, %v297
    %v299 = vrot.slane %v298, 2
    %v300 = vadd.f32 %v298, %v299
    %v301 = vrot.slane %v300, 1
    %v302 = vadd.f32 %v300, %v301
    %s303 = vtos %v302
    %v304 = vstv %s303
    %v305 = vmax.f32 %v304, 1.0
    %v306 = vsub.f32 0.0, %v294
    %v307 = vrcp.pop %v305
    %v308 = vmul.f32 %v306, %v307
    %vm309 = vcmask 0
    %310 = vst.msk [vmem:[#allocation7] sm:$0x1] %vm309, %v308
    // Predicated region
    $region18: #{tpu_custom_call.1} parent=1 // pred_check
      _
    $region19: #{tpu_custom_call.1} parent=1 // pred_check_branch
      %312 = sbr.rel (0) target = $region21
    $region20: #{tpu_custom_call.1} parent=1 // pred_region
      %s314 = ssub.s32 16, 16
      %315 = vsyncadd [#allocation4], %s314
      %s317 = sshll.u32 [#allocation7], 4
      %s318 = int_to_ptr.vmem [resolvable:$true] %s317
      %320 = dma.vmem_to_hbm [thread:$0]  %s318, 16, %s2, [#allocation4]
    $region21: #{tpu_custom_call.1} parent=1 // pred_fallthru
      _
    // Predicated region
    $region22: #{tpu_custom_call.1} parent=1 // pred_check
      _
    $region23: #{tpu_custom_call.1} parent=1 // pred_check_branch
      %322 = sbr.rel (0) target = $region25
    $region24: #{tpu_custom_call.1} parent=1 // pred_region
      %323 = dma.done [#allocation4], 16
    $region25: #{tpu_custom_call.1} parent=1 // pred_fallthru
      _
    %324 = vsyncpa [#allocation3], 1
    %325 = vsyncpa [#allocation6], 1
    %326 = vsyncpa [#allocation4], 1

</llo_original>
